<compile_context>
chip_gen: v5e
topology: v5e:2x2
jax: 0.10.0
libtpu: 0.0.40
codegen_flags: <defaults>
</compile_context>

<pallas_src>
import functools

import jax
import jax.numpy as jnp
from jax.experimental import pallas as pl
from jax.experimental.pallas import tpu as pltpu


def _sq_kernel_vpu(x_ref, w_ref, shift_ref, o_ref):
    """VPU multiply-accumulate path for tiny Cin.

    x_ref:     (Cin, TP)   pixel tile (pixels on lanes)
    w_ref:     (Cout, Cin) conv weight pre-multiplied by BN scale (resident)
    shift_ref: (Cout, 1)   folded bias: scale*(conv_b - mean) + beta (f32)
    o_ref:     (Cout, TP)
    """
    x = x_ref[...].astype(jnp.float32)          # (Cin, TP)
    w = w_ref[...].astype(jnp.float32)          # (Cout, Cin)
    cin = w.shape[1]
    acc = w[:, 0:1] * x[0:1, :]                 # (Cout, TP)
    for c in range(1, cin):                     # static unroll over Cin
        acc = acc + w[:, c:c + 1] * x[c:c + 1, :]
    y = acc + shift_ref[...]                    # folded conv bias + BN affine
    y = jnp.maximum(y, 0.0)                     # ReLU
    o_ref[...] = y.astype(o_ref.dtype)


def _sq_kernel_mxu(x_ref, w_ref, shift_ref, o_ref):
    """MXU path for production-sized channel counts."""
    y = jnp.dot(w_ref[...], x_ref[...], preferred_element_type=jnp.float32)
    y = y + shift_ref[...]
    y = jnp.maximum(y, 0.0)
    o_ref[...] = y.astype(o_ref.dtype)


def _choose_tile(hw, tp_cap, n, min_steps=4):
    """Largest multiple-of-128 divisor of hw <= tp_cap, preferring >=min_steps
    total grid steps (megacore / pipeline friendliness). None -> no divisor."""
    if hw % 128 != 0:
        return None
    cands = [d for d in range(128, min(tp_cap, hw) + 1, 128) if hw % d == 0]
    if not cands:
        return None
    good = [d for d in cands if n * (hw // d) >= min_steps]
    return max(good) if good else max(cands)


def sq_forward(x_nchw, conv_w, conv_b, bn_gamma, bn_beta, bn_mean, bn_var,
               *, eps=1e-5, tp=16384, io_dtype=jnp.float32):
    """Run SQ forward. x_nchw: (N, Cin, H, W) -> (N, 4*Cin, H, W)."""
    n, cin, h, w = x_nchw.shape
    cout = conv_w.shape[0]
    assert conv_w.shape == (cout, cin, 1, 1)
    hw = h * w

    io_bytes = jnp.dtype(io_dtype).itemsize

    # VMEM budget for double-buffered in+out tiles: stay well under v7x's
    # 64 MiB physical (also fine on v5e/v6e once vmem_limit_bytes is raised).
    vmem_budget = 48 * 1024 * 1024
    per_pixel_bytes = 2 * (cin + cout) * io_bytes
    tp_budget = max(128, (vmem_budget // per_pixel_bytes) // 128 * 128)
    tp_cap = max(128, min(tp, tp_budget))

    tp_eff = _choose_tile(hw, tp_cap, n)
    padded = tp_eff is None
    if padded:
        # TODO(synk): ragged H*W (not a multiple of 128) falls back to a padded
        # copy + slice (extra HBM pass); an in-kernel masked tail store would
        # remove it, but H*W is a multiple of 128 in practice.
        tp_eff = min(tp_cap, ((hw + 127) // 128) * 128)
        hw_pad = ((hw + tp_eff - 1) // tp_eff) * tp_eff
    else:
        hw_pad = hw

    # NCHW -> (N, Cin, H*W): pure view/reshape, no transpose.
    x3 = x_nchw.reshape(n, cin, hw).astype(io_dtype)
    if hw_pad != hw:
        x3 = jnp.pad(x3, ((0, 0), (0, 0), (0, hw_pad - hw)))

    # Fold conv bias + eval-mode BN into weight/shift (tiny one-time host math).
    scale = bn_gamma / jnp.sqrt(bn_var + eps)                           # (Cout,)
    w_folded = (conv_w.reshape(cout, cin) * scale[:, None]).astype(io_dtype)
    shift = (scale * (conv_b - bn_mean) + bn_beta).reshape(cout, 1).astype(jnp.float32)

    # Explicit VMEM limit sized to the actual double-buffered working set.
    tile_bytes = (cin + cout) * tp_eff * io_bytes
    need = 2 * tile_bytes + cout * cin * io_bytes + cout * 4
    vmem_limit = int(min(max(2 * need, 16 * 1024 * 1024), 56 * 1024 * 1024))

    # Tiny Cin -> VPU MAC (MXU would be <1% utilized); large Cin -> MXU.
    kernel = _sq_kernel_vpu if cin <= 16 else _sq_kernel_mxu

    grid = (n, hw_pad // tp_eff)
    out3 = pl.pallas_call(
        kernel,
        out_shape=jax.ShapeDtypeStruct((n, cout, hw_pad), io_dtype),
        grid=grid,
        in_specs=[
            pl.BlockSpec((pl.Squeezed(), cin, tp_eff), lambda b, p: (b, 0, p)),  # x tile
            pl.BlockSpec((cout, cin), lambda b, p: (0, 0)),                      # folded weight
            pl.BlockSpec((cout, 1), lambda b, p: (0, 0)),                        # folded shift
        ],
        out_specs=pl.BlockSpec((pl.Squeezed(), cout, tp_eff), lambda b, p: (b, 0, p)),
        compiler_params=pltpu.CompilerParams(
            dimension_semantics=("parallel", "parallel"),
            vmem_limit_bytes=vmem_limit),
    )(x3, w_folded, shift)

    if hw_pad != hw:
        out3 = out3[:, :, :hw]
    return out3.reshape(n, cout, h, w)


if __name__ == "__main__":
    key = jax.random.PRNGKey(0)
    n, cin, spatial = 2, 4, 16
    cout = cin * 4

    k_x, k_w, k_b, k_g, k_bt, k_m, k_v = jax.random.split(key, 7)
    x = jax.random.normal(k_x, (n, cin, spatial, spatial), dtype=jnp.float32)

    # Deterministic synthetic parameters (shapes from nn.Conv2d / nn.BatchNorm2d).
    conv_w = jax.random.normal(k_w, (cout, cin, 1, 1), dtype=jnp.float32) * 0.1
    conv_b = jax.random.normal(k_b, (cout,), dtype=jnp.float32) * 0.1
    bn_gamma = 1.0 + 0.1 * jax.random.normal(k_g, (cout,), dtype=jnp.float32)
    bn_beta = 0.1 * jax.random.normal(k_bt, (cout,), dtype=jnp.float32)
    bn_mean = 0.1 * jax.random.normal(k_m, (cout,), dtype=jnp.float32)
    bn_var = jnp.abs(1.0 + 0.1 * jax.random.normal(k_v, (cout,), dtype=jnp.float32))

    # Reference in plain JAX (same eval-mode BN semantics), f32.
    ref = jnp.einsum('nchw,oc->nohw', x, conv_w.reshape(cout, cin)) \
          + conv_b[None, :, None, None]
    scale = bn_gamma / jnp.sqrt(bn_var + 1e-5)
    ref = (ref - bn_mean[None, :, None, None]) * scale[None, :, None, None] \
          + bn_beta[None, :, None, None]
    ref = jnp.maximum(ref, 0.0)

    # f32 I/O path (tight tolerance).
    fwd_f32 = jax.jit(functools.partial(sq_forward, eps=1e-5))
    out_f32 = jax.block_until_ready(
        fwd_f32(x, conv_w, conv_b, bn_gamma, bn_beta, bn_mean, bn_var))
    assert out_f32.shape == (n, cout, spatial, spatial)
    assert jnp.allclose(out_f32, ref, atol=1e-4, rtol=1e-4)

    # bf16 I/O path (halved HBM traffic; loose tolerance from bf16 storage).
    fwd_bf16 = jax.jit(functools.partial(sq_forward, eps=1e-5, io_dtype=jnp.bfloat16))
    out_bf16 = jax.block_until_ready(
        fwd_bf16(x, conv_w, conv_b, bn_gamma, bn_beta, bn_mean, bn_var))
    assert out_bf16.shape == (n, cout, spatial, spatial)
    assert jnp.allclose(out_bf16.astype(jnp.float32), ref, atol=5e-2, rtol=5e-2)

    print("KERNEL_OK")
</pallas_src>

<mosaic_0001>
module attributes {stable_mosaic.version = 11 : i64} {
  func.func @_sq_kernel_vpu(%arg0: i32, %arg1: i32, %arg2: memref<1x4x128xf32, #tpu.memory_space<vmem>>, %arg3: memref<16x4xf32, #tpu.memory_space<vmem>>, %arg4: memref<16x1xf32, #tpu.memory_space<vmem>>, %arg5: memref<1x16x128xf32, #tpu.memory_space<vmem>>) attributes {dimension_semantics = [#tpu.dimension_semantics<parallel>, #tpu.dimension_semantics<parallel>], iteration_bounds = array<i64: 2, 2>, scalar_prefetch = 0 : i64, scratch_operands = 0 : i64, tpu.core_type = #tpu.core_type<tc>, window_params = [{transform_indices = @transform_0, window_bounds = array<i64: 1, 4, 128>}, {pipeline_mode = #tpu.pipeline_mode<synchronous>, transform_indices = @transform_1, window_bounds = array<i64: 16, 4>}, {pipeline_mode = #tpu.pipeline_mode<synchronous>, transform_indices = @transform_2, window_bounds = array<i64: 16, 1>}, {transform_indices = @transform_3, window_bounds = array<i64: 1, 16, 128>}]} {
    %c0 = arith.constant 0 : index
    %c0_0 = arith.constant 0 : index
    %c0_1 = arith.constant 0 : index
    %0 = vector.load %arg2[%c0, %c0_0, %c0_1] : memref<1x4x128xf32, #tpu.memory_space<vmem>>, vector<1x4x128xf32>
    %1 = vector.shape_cast %0 : vector<1x4x128xf32> to vector<4x128xf32>
    %c0_2 = arith.constant 0 : index
    %c0_3 = arith.constant 0 : index
    %2 = vector.load %arg3[%c0_2, %c0_3] : memref<16x4xf32, #tpu.memory_space<vmem>>, vector<16x4xf32>
    %3 = vector.extract_strided_slice %2 {offsets = [0, 0], sizes = [16, 1], strides = [1, 1]} : vector<16x4xf32> to vector<16x1xf32>
    %4 = vector.extract_strided_slice %1 {offsets = [0, 0], sizes = [1, 128], strides = [1, 1]} : vector<4x128xf32> to vector<1x128xf32>
    %5 = vector.broadcast %3 : vector<16x1xf32> to vector<16x128xf32>
    %6 = vector.broadcast %4 : vector<1x128xf32> to vector<16x128xf32>
    %7 = arith.mulf %5, %6 : vector<16x128xf32>
    %8 = vector.extract_strided_slice %2 {offsets = [0, 1], sizes = [16, 1], strides = [1, 1]} : vector<16x4xf32> to vector<16x1xf32>
    %9 = vector.extract_strided_slice %1 {offsets = [1, 0], sizes = [1, 128], strides = [1, 1]} : vector<4x128xf32> to vector<1x128xf32>
    %10 = vector.broadcast %8 : vector<16x1xf32> to vector<16x128xf32>
    %11 = vector.broadcast %9 : vector<1x128xf32> to vector<16x128xf32>
    %12 = arith.mulf %10, %11 : vector<16x128xf32>
    %13 = arith.addf %7, %12 : vector<16x128xf32>
    %14 = vector.extract_strided_slice %2 {offsets = [0, 2], sizes = [16, 1], strides = [1, 1]} : vector<16x4xf32> to vector<16x1xf32>
    %15 = vector.extract_strided_slice %1 {offsets = [2, 0], sizes = [1, 128], strides = [1, 1]} : vector<4x128xf32> to vector<1x128xf32>
    %16 = vector.broadcast %14 : vector<16x1xf32> to vector<16x128xf32>
    %17 = vector.broadcast %15 : vector<1x128xf32> to vector<16x128xf32>
    %18 = arith.mulf %16, %17 : vector<16x128xf32>
    %19 = arith.addf %13, %18 : vector<16x128xf32>
    %20 = vector.extract_strided_slice %2 {offsets = [0, 3], sizes = [16, 1], strides = [1, 1]} : vector<16x4xf32> to vector<16x1xf32>
    %21 = vector.extract_strided_slice %1 {offsets = [3, 0], sizes = [1, 128], strides = [1, 1]} : vector<4x128xf32> to vector<1x128xf32>
    %22 = vector.broadcast %20 : vector<16x1xf32> to vector<16x128xf32>
    %23 = vector.broadcast %21 : vector<1x128xf32> to vector<16x128xf32>
    %24 = arith.mulf %22, %23 : vector<16x128xf32>
    %25 = arith.addf %19, %24 : vector<16x128xf32>
    %c0_4 = arith.constant 0 : index
    %c0_5 = arith.constant 0 : index
    %26 = vector.load %arg4[%c0_4, %c0_5] : memref<16x1xf32, #tpu.memory_space<vmem>>, vector<16x1xf32>
    %27 = vector.broadcast %26 : vector<16x1xf32> to vector<16x128xf32>
    %28 = arith.addf %25, %27 : vector<16x128xf32>
    %cst = arith.constant 0.000000e+00 : f32
    %29 = vector.broadcast %cst : f32 to vector<16x128xf32>
    %30 = arith.maximumf %28, %29 : vector<16x128xf32>
    %c0_6 = arith.constant 0 : index
    %c0_7 = arith.constant 0 : index
    %c0_8 = arith.constant 0 : index
    %31 = vector.load %arg5[%c0_6, %c0_7, %c0_8] : memref<1x16x128xf32, #tpu.memory_space<vmem>>, vector<1x16x128xf32>
    %32 = vector.shape_cast %31 : vector<1x16x128xf32> to vector<16x128xf32>
    %33 = vector.shape_cast %30 : vector<16x128xf32> to vector<1x16x128xf32>
    tpu.vector_store %arg5[%c0_6, %c0_7, %c0_8], %33 {strides = array<i32>} : memref<1x16x128xf32, #tpu.memory_space<vmem>>, vector<1x16x128xf32>,
    return
  }
  func.func @transform_0(%arg0: i32, %arg1: i32) -> (i32, i32, i32) {
    %c0_i32 = arith.constant 0 : i32
    %c0_i32_0 = arith.constant 0 : i32
    return %arg0, %c0_i32, %arg1 : i32, i32, i32
  }
  func.func @transform_1(%arg0: i32, %arg1: i32) -> (i32, i32) {
    %c0_i32 = arith.constant 0 : i32
    %c0_i32_0 = arith.constant 0 : i32
    %c0_i32_1 = arith.constant 0 : i32
    return %c0_i32, %c0_i32_0 : i32, i32
  }
  func.func @transform_2(%arg0: i32, %arg1: i32) -> (i32, i32) {
    %c0_i32 = arith.constant 0 : i32
    %c0_i32_0 = arith.constant 0 : i32
    %c0_i32_1 = arith.constant 0 : i32
    return %c0_i32, %c0_i32_0 : i32, i32
  }
  func.func @transform_3(%arg0: i32, %arg1: i32) -> (i32, i32, i32) {
    %c0_i32 = arith.constant 0 : i32
    %c0_i32_0 = arith.constant 0 : i32
    return %arg0, %c0_i32, %arg1 : i32, i32, i32
  }
}

</mosaic_0001>

<llo_original>
// kernel: sq_forward.1
$region0: #{sq_forward.1}
  #allocation0 [shape = 'u32[]', space=smem, size = 0x4, offset = 0x4, fixed_abs, tag = 'smem constant byte address 0x4 - core index']
  #allocation1 [shape = 'u32[72,128]{1,0:T(1,128)}', space=vmem, size = 0x9000, scoped, tag = 'internal scratch']
  %s0 = inlined_call_operand.vmem [shape: f32[2,4,256], index: 0, kind: input, shape index: {}]
  %s1 = inlined_call_operand.vmem [shape: f32[16,4], index: 1, kind: input, shape index: {}]
  %s2 = inlined_call_operand.vmem [shape: f32[16,1], index: 2, kind: input, shape index: {}]
  %s3 = inlined_call_operand.vmem [shape: f32[2,16,256], index: 3, kind: output, shape index: {}]
  %s4 = sld [smem:[#allocation0]]
  $region79: #{sq_forward.1} parent=0
    _
  %s6 = ssub.s32 1, %s4
  %s7 = scalar_select 0, %s6, %s4
  $region1: #{sq_forward.1} parent=0
    #allocation2 [shape = 'u8[16384]{0}', space=vmem, size = 0x4000, scoped, tag = 'output window, operand 0']
    loop: start=0, step=1, limit=6
    $region2: #{sq_forward.1} parent=1 // loop_pre_header
      _
    $region3: #{sq_forward.1} parent=1 // loop_header
      %s9 = sphi 0, %s13
      %p10 = scmp.ge.s32.totalorder %s9, 6
      %s16 = sphi 0, %s28
      %s17 = sphi 0, %s24
      %s18 = sphi 0, %s16
      %s19 = sphi 0, %s17
      %s20 = sphi 0, %s18
      %s21 = sphi 0, %s19
      %s33 = sphi 0, %s35
      %s36 = sphi 0, %s33
      %s37 = sphi 0, %s36
      %s53 = sphi 0, %s37
      %s57 = sphi 0, %s57
      %s59 = sphi 0, %s57
      %s60 = sphi 0, %s59
      %s74 = sphi 0, %s60
      %s78 = sphi 0, %s78
      %s80 = sphi 0, %s78
      %s81 = sphi 0, %s80
      %s95 = sphi 0, %s81
      %s103 = sphi 0, %s105
      %s106 = sphi 0, %s103
      %s107 = sphi 0, %s106
      %s123 = sphi 0, %s107
    $region4: #{sq_forward.1} parent=1 // loop_header_branch
      %12 = sbr.rel (%p10) target = $region8
    $region5: #{sq_forward.1} parent=1 // loop_body
      %s14 = ssub.s32 %s9, 1
      %s15 = ssub.s32 %s9, 2
      %s22 = sadd.s32 1, %s17
      %p23 = scmp.ge.s32.totalorder %s22, 2
      %s24 = scalar_select %p23, 0, %s22
      %s25 = sadd.s32 1, %s16
      %s26 = scalar_select %p23, %s25, %s16
      %p27 = scmp.ge.s32.totalorder %s26, 2
      %s28 = scalar_select %p27, 0, %s26
      %s29 = ssub.s32 %s16, %s28
      %s30 = ssub.s32 %s17, %s24
      %s31 = sor.u32 %s29, %s30
      %p32 = scmp.eq.s32.totalorder %s31, 0
      %s34 = sadd.s32 %s33, 1
      %s35 = scalar_select %p32, %s33, %s34
      %p38 = pneg %p32
      %p39 = scmp.eq.s32.totalorder %s9, 3
      %p40 = por %p38, %p39
      %p41 = scmp.ne.s32.totalorder %s33, %s36
      %p42 = scmp.eq.s32.totalorder %s9, 0
      %p43 = por %p41, %p42
      %p44 = scmp.ne.s32.totalorder %s33, %s36
      %p45 = scmp.eq.s32.totalorder %s14, 3
      %p46 = por %p44, %p45
      %p47 = scmp.ne.s32.totalorder %s36, %s37
      %p48 = scmp.eq.s32.totalorder %s14, 0
      %p49 = por %p47, %p48
      %p50 = scmp.ne.s32.totalorder %s36, %s37
      %p51 = scmp.eq.s32.totalorder %s15, 3
      %p52 = por %p50, %p51
      %p54 = scmp.ne.s32.totalorder %s37, %s53
      %p55 = scmp.eq.s32.totalorder %s15, 0
      %p56 = por %p54, %p55
      %s58 = sadd.s32 %s57, 1
      %p61 = scmp.eq.s32.totalorder %s9, 3
      %p62 = scmp.ne.s32.totalorder %s57, %s59
      %p63 = scmp.eq.s32.totalorder %s9, 0
      %p64 = por %p62, %p63
      %p65 = scmp.ne.s32.totalorder %s57, %s59
      %p66 = scmp.eq.s32.totalorder %s14, 3
      %p67 = por %p65, %p66
      %p68 = scmp.ne.s32.totalorder %s59, %s60
      %p69 = scmp.eq.s32.totalorder %s14, 0
      %p70 = por %p68, %p69
      %p71 = scmp.ne.s32.totalorder %s59, %s60
      %p72 = scmp.eq.s32.totalorder %s15, 3
      %p73 = por %p71, %p72
      %p75 = scmp.ne.s32.totalorder %s60, %s74
      %p76 = scmp.eq.s32.totalorder %s15, 0
      %p77 = por %p75, %p76
      %s79 = sadd.s32 %s78, 1
      %p82 = scmp.eq.s32.totalorder %s9, 3
      %p83 = scmp.ne.s32.totalorder %s78, %s80
      %p84 = scmp.eq.s32.totalorder %s9, 0
      %p85 = por %p83, %p84
      %p86 = scmp.ne.s32.totalorder %s78, %s80
      %p87 = scmp.eq.s32.totalorder %s14, 3
      %p88 = por %p86, %p87
      %p89 = scmp.ne.s32.totalorder %s80, %s81
      %p90 = scmp.eq.s32.totalorder %s14, 0
      %p91 = por %p89, %p90
      %p92 = scmp.ne.s32.totalorder %s80, %s81
      %p93 = scmp.eq.s32.totalorder %s15, 3
      %p94 = por %p92, %p93
      %p96 = scmp.ne.s32.totalorder %s81, %s95
      %p97 = scmp.eq.s32.totalorder %s15, 0
      %p98 = por %p96, %p97
      %s99 = ssub.s32 %s16, %s28
      %s100 = ssub.s32 %s17, %s24
      %s101 = sor.u32 %s99, %s100
      %p102 = scmp.eq.s32.totalorder %s101, 0
      %s104 = sadd.s32 %s103, 1
      %s105 = scalar_select %p102, %s103, %s104
      %p108 = pneg %p102
      %p109 = scmp.eq.s32.totalorder %s9, 3
      %p110 = por %p108, %p109
      %p111 = scmp.ne.s32.totalorder %s103, %s106
      %p112 = scmp.eq.s32.totalorder %s9, 0
      %p113 = por %p111, %p112
      %p114 = scmp.ne.s32.totalorder %s103, %s106
      %p115 = scmp.eq.s32.totalorder %s14, 3
      %p116 = por %p114, %p115
      %p117 = scmp.ne.s32.totalorder %s106, %s107
      %p118 = scmp.eq.s32.totalorder %s14, 0
      %p119 = por %p117, %p118
      %p120 = scmp.ne.s32.totalorder %s106, %s107
      %p121 = scmp.eq.s32.totalorder %s15, 3
      %p122 = por %p120, %p121
      %p124 = scmp.ne.s32.totalorder %s107, %s123
      %p125 = scmp.eq.s32.totalorder %s15, 0
      %p126 = por %p124, %p125
      %p127 = scmp.le.s32.totalorder 1, %s9
      %p128 = scmp.lt.s32.totalorder %s9, 5
      %p129 = pnand %p127, %p128
      %p130 = pneg %p129
      // Predicated region
      $region9: #{sq_forward.1} parent=5 // pred_check
        _
      $region10: #{sq_forward.1} parent=5 // pred_check_branch
        %132 = sbr.rel (%p129) target = $region12
      $region11: #{sq_forward.1} parent=5 // pred_region
        %s133 = ssub.s32 %s9, 1
        // Predicated region
        $region13: #{sq_forward.1} parent=11 // pred_check
          %p134 = pneg %p70
        $region14: #{sq_forward.1} parent=11 // pred_check_branch
          %136 = sbr.rel (%p134) target = $region16
        $region15: #{sq_forward.1} parent=11 // pred_region
          _
        $region16: #{sq_forward.1} parent=11 // pred_fallthru
          _
        // Predicated region
        $region17: #{sq_forward.1} parent=11 // pred_check
          %p137 = pneg %p91
        $region18: #{sq_forward.1} parent=11 // pred_check_branch
          %139 = sbr.rel (%p137) target = $region20
        $region19: #{sq_forward.1} parent=11 // pred_region
          _
        $region20: #{sq_forward.1} parent=11 // pred_fallthru
          _
      $region12: #{sq_forward.1} parent=5 // pred_fallthru
        _
      %p140 = scmp.lt.s32.totalorder %s9, 4
      // Predicated region
      $region21: #{sq_forward.1} parent=5 // pred_check
        %p141 = pneg %p140
      $region22: #{sq_forward.1} parent=5 // pred_check_branch
        %143 = sbr.rel (%p141) target = $region24
      $region23: #{sq_forward.1} parent=5 // pred_region
        // Predicated region
        $region25: #{sq_forward.1} parent=23 // pred_check
          %p144 = pneg %p43
        $region26: #{sq_forward.1} parent=23 // pred_check_branch
          %146 = sbr.rel (%p144) target = $region28
        $region27: #{sq_forward.1} parent=23 // pred_region
          %p147 = scmp.lt.s32.totalorder %s16, 1
          %s148 = scalar_select %p147, %s16, 1
          %p149 = scmp.lt.s32.totalorder %s17, 1
          %s150 = scalar_select %p149, %s17, 1
          %s151 = smul.addr %s148, 2
          %s152 = sadd.s32 %s150, %s151
          %s153 = smul.addr %s152, 4
          %s154 = scalar_lea.vmem %s0, %s153
        $region28: #{sq_forward.1} parent=23 // pred_fallthru
          _
      $region24: #{sq_forward.1} parent=5 // pred_fallthru
        _
      %p155 = scmp.le.s32.totalorder 1, %s9
      %p156 = scmp.lt.s32.totalorder %s9, 5
      %p157 = pnand %p155, %p156
      %p158 = pneg %p157
      // Predicated region
      $region29: #{sq_forward.1} parent=5 // pred_check
        _
      $region30: #{sq_forward.1} parent=5 // pred_check_branch
        %160 = sbr.rel (%p157) target = $region32
      $region31: #{sq_forward.1} parent=5 // pred_region
        %s161 = ssub.s32 %s9, 1
        %p162 = scmp.lt.s32.totalorder %s18, 1
        %s163 = scalar_select %p162, %s18, 1
        %p164 = scmp.lt.s32.totalorder %s19, 1
        %s165 = scalar_select %p164, %s19, 1
        %s166 = smul.addr %s163, 2
        %s167 = sadd.s32 %s165, %s166
        %s168 = smul.addr %s167, 4
        %s169 = scalar_lea.vmem %s0, %s168
        %p170 = pneg %p49
        %p171 = pneg %p46
        %p172 = pneg %p70
        %p173 = pneg %p67
        %p174 = pneg %p91
        %p175 = pneg %p88
        %p176 = pneg %p119
        %p177 = pneg %p116
        %s178 = sand.u32 %s106, 1
        %s179 = sand.u32 %s106, 1
        %s180 = smul.addr %s179, 16
        %s181 = scalar_lea.vmem [#allocation2], %s180
        %p182 = scmp.lt.s32.totalorder %s18, 1
        %s183 = scalar_select %p182, %s18, 1
        %p184 = scmp.lt.s32.totalorder %s19, 1
        %s185 = scalar_select %p184, %s19, 1
        %s186 = smul.addr %s183, 2
        %s187 = sadd.s32 %s185, %s186
        %s188 = smul.addr %s187, 4
        %s189 = scalar_lea.vmem %s0, %s188
        %v190 = vld [vmem:[%s189] sm:$0xf]
        %v191 = vld [vmem:[%s1] sm:$0xff]
        %v192 = vld [vmem:[%s1 + $0x8] sm:$0xff]
        %194 = vset.pattern.permute.xlu0 0
        %195 = vperm.xlu0 %194, %v191
        %v196 = vpop.permute.xlu0 %195
        %199 = vset.pattern.permute.xlu0 0
        %200 = vperm.xlu0 %199, %v192
        %v201 = vpop.permute.xlu0 %200
        %v203 = vperm.slane %v190, 0
        %v204 = vmul.f32 %v196, %v203
        %v205 = vmul.f32 %v201, %v203
        %206 = vset.pattern.permute.xlu0 1
        %207 = vperm.xlu0 %206, %v191
        %v208 = vpop.permute.xlu0 %207
        %210 = vset.pattern.permute.xlu0 1
        %211 = vperm.xlu0 %210, %v192
        %v212 = vpop.permute.xlu0 %211
        %v214 = vperm.slane %v190, 1
        %v215 = vmul.f32 %v208, %v214
        %v216 = vmul.f32 %v212, %v214
        %v217 = vadd.f32 %v204, %v215
        %v218 = vadd.f32 %v205, %v216
        %219 = vset.pattern.permute.xlu0 2
        %220 = vperm.xlu0 %219, %v191
        %v221 = vpop.permute.xlu0 %220
        %223 = vset.pattern.permute.xlu0 2
        %224 = vperm.xlu0 %223, %v192
        %v225 = vpop.permute.xlu0 %224
        %v227 = vperm.slane %v190, 2
        %v228 = vmul.f32 %v221, %v227
        %v229 = vmul.f32 %v225, %v227
        %v230 = vadd.f32 %v217, %v228
        %v231 = vadd.f32 %v218, %v229
        %232 = vset.pattern.permute.xlu0 3
        %233 = vperm.xlu0 %232, %v191
        %v234 = vpop.permute.xlu0 %233
        %236 = vset.pattern.permute.xlu0 3
        %237 = vperm.xlu0 %236, %v192
        %v238 = vpop.permute.xlu0 %237
        %v240 = vperm.slane %v190, 3
        %v241 = vmul.f32 %v234, %v240
        %v242 = vmul.f32 %v238, %v240
        %v243 = vadd.f32 %v230, %v241
        %v244 = vadd.f32 %v231, %v242
        %v245 = vld [vmem:[%s2] sm:$0xff]
        %v246 = vld [vmem:[%s2 + $0x8] sm:$0xff]
        %248 = vset.pattern.permute.xlu0 0
        %249 = vperm.xlu0 %248, %v245
        %v250 = vpop.permute.xlu0 %249
        %253 = vset.pattern.permute.xlu0 0
        %254 = vperm.xlu0 %253, %v246
        %v255 = vpop.permute.xlu0 %254
        %v257 = vadd.f32 %v243, %v250
        %v258 = vadd.f32 %v244, %v255
        %v259 = vmax.f32 %v257, 0.0
        %v260 = vmax.f32 %v258, 0.0
        %261 = vst [vmem:[%s181] sm:$0xff] %v259
        %262 = vst [vmem:[%s181 + $0x8] sm:$0xff] %v260
        %s263 = sand.u32 %s106, 1
        %s264 = sand.u32 %s106, 1
        %s265 = smul.addr %s264, 16
        %s266 = scalar_lea.vmem [#allocation2], %s265
        // Predicated region
        $region33: #{sq_forward.1} parent=31 // pred_check
          %p267 = pneg %p116
        $region34: #{sq_forward.1} parent=31 // pred_check_branch
          %269 = sbr.rel (%p267) target = $region36
        $region35: #{sq_forward.1} parent=31 // pred_region
          %s270 = smul.addr %s18, 4
          %s271 = sadd.s32 %s19, %s270
          %s272 = smul.addr %s271, 8
          %s273 = scalar_lea.vmem %s3, %s272
          // Predicated region
          $region37: #{sq_forward.1} parent=35 // pred_check
            _
          $region38: #{sq_forward.1} parent=35 // pred_check_branch
            %275 = sbr.rel (0) target = $region40
          $region39: #{sq_forward.1} parent=35 // pred_region
            // Predicated region
            $region41: #{sq_forward.1} parent=39 // pred_check
              _
            $region42: #{sq_forward.1} parent=39 // pred_check_branch
              %277 = sbr.rel (0) target = $region44
            $region43: #{sq_forward.1} parent=39 // pred_region
              // Predicated region
              $region56: #{sq_forward.1} parent=43 // pred_check
                _
              $region57: #{sq_forward.1} parent=43 // pred_check_branch
                %295 = sbr.rel (0) target = $region59
              $region58: #{sq_forward.1} parent=43 // pred_region
                loop: start=0, step=1, limit=1
                $region60: #{sq_forward.1} parent=58 // loop_pre_header
                  _
                $region61: #{sq_forward.1} parent=58 // loop_header
                  %s297 = sphi 0, %s301
                  %p298 = scmp.ge.s32.totalorder %s297, 1
                  %s302 = sphi %s266, %s266
                  %s303 = sphi %s273, %s273
                $region62: #{sq_forward.1} parent=58 // loop_header_branch
                  %300 = sbr.rel (%p298) target = $region66
                $region63: #{sq_forward.1} parent=58 // loop_body
                  %v304 = vld [vmem:[%s302] sm:$0xff]
                  %305 = vst [vmem:[%s303] sm:$0xff] %v304
                  %v306 = vld [vmem:[%s302 + $0x8] sm:$0xff]
                  %307 = vst [vmem:[%s303 + $0x10] sm:$0xff] %v306
                $region64: #{sq_forward.1} parent=58 // loop_footer
                  %s301 = sadd.s32 1, %s297
                $region65: #{sq_forward.1} parent=58 // loop_footer_branch
                  %296 = sbr.rel target = $region61
                $region66: #{sq_forward.1} parent=58 // loop_exit
                  _
              $region59: #{sq_forward.1} parent=43 // pred_fallthru
                _
              // Predicated region
              $region67: #{sq_forward.1} parent=43 // pred_check
                _
              $region68: #{sq_forward.1} parent=43 // pred_check_branch
                %309 = sbr.rel target = $region70
              $region69: #{sq_forward.1} parent=43 // pred_region
                _
              $region70: #{sq_forward.1} parent=43 // pred_fallthru
                _
            $region44: #{sq_forward.1} parent=39 // pred_fallthru
              _
            // Predicated region
            $region45: #{sq_forward.1} parent=39 // pred_check
              _
            $region46: #{sq_forward.1} parent=39 // pred_check_branch
              %279 = sbr.rel target = $region48
            $region47: #{sq_forward.1} parent=39 // pred_region
              %s281 = ssub.s32 256, 1
              loop: start=0, step=1, limit=1
              $region49: #{sq_forward.1} parent=47 // loop_pre_header
                _
              $region50: #{sq_forward.1} parent=47 // loop_header
                %s283 = sphi 0, %s287
                %p284 = scmp.ge.s32.totalorder %s283, 1
                %s288 = sphi %s266, %s266
                %s289 = sphi %s273, %s273
              $region51: #{sq_forward.1} parent=47 // loop_header_branch
                %286 = sbr.rel (%p284) target = $region55
              $region52: #{sq_forward.1} parent=47 // loop_body
                %v290 = vld [vmem:[%s288] sm:%s281]
                %291 = vst [vmem:[%s289] sm:%s281] %v290
                %v292 = vld [vmem:[%s288 + $0x8] sm:%s281]
                %293 = vst [vmem:[%s289 + $0x10] sm:%s281] %v292
              $region53: #{sq_forward.1} parent=47 // loop_footer
                %s287 = sadd.s32 1, %s283
              $region54: #{sq_forward.1} parent=47 // loop_footer_branch
                %282 = sbr.rel target = $region50
              $region55: #{sq_forward.1} parent=47 // loop_exit
                _
            $region48: #{sq_forward.1} parent=39 // pred_fallthru
              _
          $region40: #{sq_forward.1} parent=35 // pred_fallthru
            _
          %310 = vnop
        $region36: #{sq_forward.1} parent=31 // pred_fallthru
          _
      $region32: #{sq_forward.1} parent=5 // pred_fallthru
        _
      %p311 = scmp.le.s32.totalorder 2, %s9
      // Predicated region
      $region71: #{sq_forward.1} parent=5 // pred_check
        %p312 = pneg %p311
      $region72: #{sq_forward.1} parent=5 // pred_check_branch
        %314 = sbr.rel (%p312) target = $region74
      $region73: #{sq_forward.1} parent=5 // pred_region
        %s315 = ssub.s32 %s9, 2
        // Predicated region
        $region75: #{sq_forward.1} parent=73 // pred_check
          %p316 = pneg %p122
        $region76: #{sq_forward.1} parent=73 // pred_check_branch
          %318 = sbr.rel (%p316) target = $region78
        $region77: #{sq_forward.1} parent=73 // pred_region
          %s319 = sand.u32 %s107, 1
          %s320 = sand.u32 %s107, 1
          %s321 = smul.addr %s320, 16
          %s322 = scalar_lea.vmem [#allocation2], %s321
        $region78: #{sq_forward.1} parent=73 // pred_fallthru
          _
      $region74: #{sq_forward.1} parent=5 // pred_fallthru
        _
    $region6: #{sq_forward.1} parent=1 // loop_footer
      %s13 = sadd.s32 1, %s9
    $region7: #{sq_forward.1} parent=1 // loop_footer_branch
      %8 = sbr.rel target = $region3
    $region8: #{sq_forward.1} parent=1 // loop_exit
      _

</llo_original>
